<compile_context>
chip_gen: v7x
topology: tpu7x:2x2x1
jax: 0.10.0
libtpu: 0.0.40
codegen_flags: <defaults>
</compile_context>

<pallas_src>
import functools

import jax
import jax.numpy as jnp
from jax import lax
from jax.experimental import pallas as pl
from jax.experimental.pallas import tpu as pltpu

_CLASS_TILE = 2048  # class-head tile width (multiple of 128)


def _round_up(x, m):
    return ((x + m - 1) // m) * m


def _vmem_capacity_bytes():
    """Physical per-core VMEM (128 MiB on v5e/v6e, 64 MiB on v7x)."""
    try:
        return int(pltpu.get_tpu_info().vmem_capacity_bytes)
    except Exception:
        return 64 << 20  # conservative fallback (v7x-sized core)


def residual_fcnet_kernel(depth,
                          x_ref, w0_ref, b0_ref,
                          w1s_ref, b1s_ref, w2s_ref, b2s_ref,
                          wc_ref, out_ref, h_ref):
    """Grid = (batch_tiles, class_tiles); class axis innermost ('arbitrary').

    x_ref  : [TB, NI_al]           (bf16)  tiled along batch
    w0_ref : [NI_al, F_pad]        (bf16)  resident, single-buffered
    b0_ref : [1, F_pad]            (f32)
    w1s_ref: [depth, F_pad, F_pad] (bf16)
    b1s_ref: [depth, 1, F_pad]     (f32)
    w2s_ref: [depth, F_pad, F_pad] (bf16)
    b2s_ref: [depth, 1, F_pad]     (f32)
    wc_ref : [F_pad, TC]           (bf16)  streamed along the class axis
    out_ref: [TB, TC]              (bf16)
    h_ref  : [TB, F_pad]           (bf16)  VMEM scratch: cached trunk features
    """
    j = pl.program_id(1)

    # Residual trunk: computed once per batch tile (j == 0), cached in VMEM.
    @pl.when(j == 0)
    def _():
        h = jnp.dot(x_ref[...], w0_ref[...], preferred_element_type=jnp.float32)
        h = jnp.maximum(h + b0_ref[...], 0.0)

        def res_block(i, h):
            y = jnp.dot(h.astype(jnp.bfloat16), w1s_ref[i],
                        preferred_element_type=jnp.float32)
            # dropout1: identity at inference time; fuse bias + ReLU + bf16 cast.
            y = jnp.maximum(y + b1s_ref[i], 0.0).astype(jnp.bfloat16)
            y = jnp.dot(y, w2s_ref[i], preferred_element_type=jnp.float32)
            y = jnp.maximum(y + b2s_ref[i], 0.0)
            return h + y

        if depth <= 8:
            # Static unroll for short stacks.
            for i in range(depth):
                h = res_block(i, h)
        else:
            # Keep code size / vreg live ranges bounded for deep stacks.
            h = lax.fori_loop(0, depth, res_block, h, unroll=2)

        h_ref[...] = h.astype(jnp.bfloat16)

    # Class-head tile: logits on the MXU, sigmoid on the EUP, bf16 store.
    logits = jnp.dot(h_ref[...], wc_ref[...], preferred_element_type=jnp.float32)
    out_ref[...] = jax.nn.sigmoid(logits).astype(out_ref.dtype)


def prepare_params(params, depth):
    """One-time glue at parameter-load time: transpose to [in, out], pad to
    kernel-friendly shapes (features/classes to 128 lanes, input dim only to 8
    sublanes), cast weights to bf16 (biases stay f32)."""
    F, NI = params["w0"].shape
    C = params["wc"].shape[0]
    NI_al = _round_up(NI, 8)                       # sublane alignment only
    F_pad = _round_up(F, 128)
    TC = min(_CLASS_TILE, _round_up(C, 128))
    C_pad = _round_up(C, TC)                       # divisible by the class tile

    def pad2(a, rows, cols):
        return jnp.pad(a, ((0, rows - a.shape[0]), (0, cols - a.shape[1])))

    w0 = pad2(params["w0"].T, NI_al, F_pad).astype(jnp.bfloat16)
    b0 = jnp.pad(params["b0"], (0, F_pad - F)).reshape(1, F_pad).astype(jnp.float32)

    w1s = jnp.pad(jnp.transpose(params["w1"], (0, 2, 1)),
                  ((0, 0), (0, F_pad - F), (0, F_pad - F))).astype(jnp.bfloat16)
    b1s = jnp.pad(params["b1"], ((0, 0), (0, F_pad - F))
                  ).reshape(depth, 1, F_pad).astype(jnp.float32)
    w2s = jnp.pad(jnp.transpose(params["w2"], (0, 2, 1)),
                  ((0, 0), (0, F_pad - F), (0, F_pad - F))).astype(jnp.bfloat16)
    b2s = jnp.pad(params["b2"], ((0, 0), (0, F_pad - F))
                  ).reshape(depth, 1, F_pad).astype(jnp.float32)

    wc = pad2(params["wc"].T, F_pad, C_pad).astype(jnp.bfloat16)

    return {"w0": w0, "b0": b0, "w1s": w1s, "b1s": b1s,
            "w2s": w2s, "b2s": b2s, "wc": wc}


@functools.partial(jax.jit, static_argnames=("depth", "num_classes"))
def residual_fcnet_forward(x, prepped, depth, num_classes):
    """Pads x on the batch axis, launches the (batch, class)-tiled kernel,
    slices off padding. Returns bf16 sigmoid probabilities."""
    B, NI = x.shape
    NI_al, F_pad = prepped["w0"].shape
    C_pad = prepped["wc"].shape[1]

    vmem_cap = _vmem_capacity_bytes()
    vmem_target = vmem_cap - (8 << 20)        # headroom for Mosaic scratch
    small_vmem = vmem_cap <= (64 << 20)       # v7x-sized core

    # --- batch tile -------------------------------------------------------
    TB_target = 256 if small_vmem else 512    # v7x vs v5e/v6e
    TB = min(TB_target, _round_up(B, 8))
    if small_vmem and B >= 16 and _round_up(B, TB) // TB < 2:
        # v7x has 2 TensorCores: make sure the 'parallel' batch axis has >= 2 steps.
        TB = _round_up((B + 1) // 2, 8)
    B_pad = _round_up(B, TB)

    # --- class tile (wc was padded to a multiple of TC in prepare_params) --
    TC = min(_CLASS_TILE, C_pad)
    assert C_pad % TC == 0, "wc padding inconsistent with class tile"
    grid = (B_pad // TB, C_pad // TC)

    # Pad x only on the batch axis (+ tiny sublane alignment of the feature dim).
    x_p = jnp.pad(x.astype(jnp.bfloat16), ((0, B_pad - B), (0, NI_al - NI)))

    # --- VMEM budget (matches the actual allocation) ------------------------
    resident_bytes = sum(int(prepped[k].size) * prepped[k].dtype.itemsize
                         for k in ("w0", "b0", "w1s", "b1s", "w2s", "b2s"))
    stream_bytes = (2 * F_pad * TC * 2        # wc, double-buffered bf16
                    + 2 * TB * NI_al * 2      # x, double-buffered bf16
                    + 2 * TB * TC * 2)        # out, double-buffered bf16
    scratch_bytes = TB * F_pad * 2            # cached trunk features (bf16)
    work_bytes = 4 * TB * F_pad * 4 + TB * TC * 4   # f32 h/y temps + logits
    need = resident_bytes + stream_bytes + scratch_bytes + work_bytes
    assert need <= vmem_target, (
        f"ResidualFCNet kernel needs ~{need >> 20} MiB VMEM but only "
        f"{vmem_target >> 20} MiB is available on this core; reduce TB/TC "
        f"or num_filts/depth.")
    vmem_limit = int(min(vmem_target, max(need + (4 << 20), 16 << 20)))

    flops = 2 * B_pad * (NI_al * F_pad + 2 * depth * F_pad * F_pad
                         + F_pad * C_pad)
    bytes_accessed = (resident_bytes
                      + grid[0] * int(prepped["wc"].size) * 2
                      + B_pad * NI_al * 2 + B_pad * C_pad * 2)
    cost = pl.CostEstimate(flops=flops, transcendentals=B_pad * C_pad,
                           bytes_accessed=bytes_accessed)

    w2d = lambda i, j: (0, 0)
    w3d = lambda i, j: (0, 0, 0)
    once = pl.Buffered(1)   # grid-invariant inputs: no double-buffering

    out = pl.pallas_call(
        functools.partial(residual_fcnet_kernel, depth),
        out_shape=jax.ShapeDtypeStruct((B_pad, C_pad), jnp.bfloat16),
        grid=grid,
        in_specs=[
            pl.BlockSpec((TB, NI_al), lambda i, j: (i, 0)),               # x (batch-tiled)
            pl.BlockSpec((NI_al, F_pad), w2d, pipeline_mode=once),        # w0
            pl.BlockSpec((1, F_pad), w2d, pipeline_mode=once),            # b0
            pl.BlockSpec((depth, F_pad, F_pad), w3d, pipeline_mode=once),  # w1 stack
            pl.BlockSpec((depth, 1, F_pad), w3d, pipeline_mode=once),      # b1 stack
            pl.BlockSpec((depth, F_pad, F_pad), w3d, pipeline_mode=once),  # w2 stack
            pl.BlockSpec((depth, 1, F_pad), w3d, pipeline_mode=once),      # b2 stack
            pl.BlockSpec((F_pad, TC), lambda i, j: (0, j)),               # class head (streamed)
        ],
        out_specs=pl.BlockSpec((TB, TC), lambda i, j: (i, j)),
        scratch_shapes=[pltpu.VMEM((TB, F_pad), jnp.bfloat16)],
        compiler_params=pltpu.CompilerParams(
            dimension_semantics=("parallel", "arbitrary"),
            vmem_limit_bytes=vmem_limit),
        cost_estimate=cost,
    )(x_p, prepped["w0"], prepped["b0"], prepped["w1s"], prepped["b1s"],
      prepped["w2s"], prepped["b2s"], prepped["wc"])

    return out[:B, :num_classes]


def reference_forward(x, params, depth):
    """Pure-JAX f32 reference mirroring the PyTorch module."""
    h = jnp.maximum(x @ params["w0"].T + params["b0"], 0.0)
    for i in range(depth):
        y = jnp.maximum(h @ params["w1"][i].T + params["b1"][i], 0.0)
        y = jnp.maximum(y @ params["w2"][i].T + params["b2"][i], 0.0)
        h = h + y
    logits = h @ params["wc"].T
    return jax.nn.sigmoid(logits)


def init_params(key, num_inputs, num_classes, num_filts, depth):
    ks = jax.random.split(key, 8)
    scale = 0.1
    return {
        "w0": scale * jax.random.normal(ks[0], (num_filts, num_inputs), jnp.float32),
        "b0": scale * jax.random.normal(ks[1], (num_filts,), jnp.float32),
        "w1": scale * jax.random.normal(ks[2], (depth, num_filts, num_filts), jnp.float32),
        "b1": scale * jax.random.normal(ks[3], (depth, num_filts), jnp.float32),
        "w2": scale * jax.random.normal(ks[4], (depth, num_filts, num_filts), jnp.float32),
        "b2": scale * jax.random.normal(ks[5], (depth, num_filts), jnp.float32),
        "wc": scale * jax.random.normal(ks[6], (num_classes, num_filts), jnp.float32),
    }


if __name__ == "__main__":
    # Small shapes consistent with the module: x is [batch, num_inputs].
    batch = 8
    num_inputs = 4
    num_filts = 32
    num_classes = 16
    depth = 4

    key = jax.random.PRNGKey(0)
    kx, kp = jax.random.split(key)
    x = jax.random.normal(kx, (batch, num_inputs), jnp.float32)
    params = init_params(kp, num_inputs, num_classes, num_filts, depth)

    # One-time parameter preparation (kernel-ready layout: transposed, padded, bf16).
    prepped = prepare_params(params, depth)

    out = residual_fcnet_forward(x, prepped, depth, num_classes)
    out = jax.block_until_ready(out)

    ref = reference_forward(x, params, depth)
    assert out.shape == (batch, num_classes)
    # bf16 weights/activations/output with f32 accumulation vs f32 reference.
    out_f32 = out.astype(jnp.float32)
    assert jnp.allclose(out_f32, ref, atol=2e-2, rtol=2e-2), (
        f"max abs err {jnp.max(jnp.abs(out_f32 - ref))}")

    print("KERNEL_OK")
</pallas_src>

<mosaic_0001>
module attributes {stable_mosaic.version = 11 : i64} {
  func.func @residual_fcnet_kernel(%arg0: i32, %arg1: i32, %arg2: memref<8x8xbf16, #tpu.memory_space<vmem>>, %arg3: memref<8x128xbf16, #tpu.memory_space<vmem>>, %arg4: memref<1x128xf32, #tpu.memory_space<vmem>>, %arg5: memref<4x128x128xbf16, #tpu.memory_space<vmem>>, %arg6: memref<4x1x128xf32, #tpu.memory_space<vmem>>, %arg7: memref<4x128x128xbf16, #tpu.memory_space<vmem>>, %arg8: memref<4x1x128xf32, #tpu.memory_space<vmem>>, %arg9: memref<128x128xbf16, #tpu.memory_space<vmem>>, %arg10: memref<8x128xbf16, #tpu.memory_space<vmem>>, %arg11: memref<8x128xbf16, #tpu.memory_space<vmem>>) attributes {dimension_semantics = [#tpu.dimension_semantics<parallel>, #tpu.dimension_semantics<arbitrary>], iteration_bounds = array<i64: 1, 1>, scalar_prefetch = 0 : i64, scratch_operands = 1 : i64, tpu.core_type = #tpu.core_type<tc>, window_params = [{transform_indices = @transform_0, window_bounds = array<i64: 8, 8>}, {pipeline_mode = #tpu.pipeline_mode<synchronous>, transform_indices = @transform_1, window_bounds = array<i64: 8, 128>}, {pipeline_mode = #tpu.pipeline_mode<synchronous>, transform_indices = @transform_2, window_bounds = array<i64: 1, 128>}, {pipeline_mode = #tpu.pipeline_mode<synchronous>, transform_indices = @transform_3, window_bounds = array<i64: 4, 128, 128>}, {pipeline_mode = #tpu.pipeline_mode<synchronous>, transform_indices = @transform_4, window_bounds = array<i64: 4, 1, 128>}, {pipeline_mode = #tpu.pipeline_mode<synchronous>, transform_indices = @transform_5, window_bounds = array<i64: 4, 128, 128>}, {pipeline_mode = #tpu.pipeline_mode<synchronous>, transform_indices = @transform_6, window_bounds = array<i64: 4, 1, 128>}, {transform_indices = @transform_7, window_bounds = array<i64: 128, 128>}, {transform_indices = @transform_8, window_bounds = array<i64: 8, 128>}]} {
    %c0_i32 = arith.constant 0 : i32
    %0 = arith.cmpi eq, %arg1, %c0_i32 : i32
    %1 = arith.extui %0 : i1 to i32
    %c0_i32_0 = arith.constant 0 : i32
    %2 = arith.cmpi ne, %1, %c0_i32_0 : i32
    scf.if %2 {
      %c0_7 = arith.constant 0 : index
      %c0_8 = arith.constant 0 : index
      %13 = vector.load %arg2[%c0_7, %c0_8] : memref<8x8xbf16, #tpu.memory_space<vmem>>, vector<8x8xbf16>
      %c0_9 = arith.constant 0 : index
      %c0_10 = arith.constant 0 : index
      %14 = vector.load %arg3[%c0_9, %c0_10] : memref<8x128xbf16, #tpu.memory_space<vmem>>, vector<8x128xbf16>
      %cst_11 = arith.constant dense<0.000000e+00> : vector<8x128xf32>
      %15 = tpu.matmul %13, %14, %cst_11 {dimension_numbers = #tpu.dot_dimension_numbers<[1], [0], [0], [1], [0, 0, 1, 1], [], []>} : vector<8x8xbf16>, vector<8x128xbf16>, vector<8x128xf32> -> vector<8x128xf32>
      %c0_12 = arith.constant 0 : index
      %c0_13 = arith.constant 0 : index
      %16 = vector.load %arg4[%c0_12, %c0_13] : memref<1x128xf32, #tpu.memory_space<vmem>>, vector<1x128xf32>
      %17 = vector.broadcast %16 : vector<1x128xf32> to vector<8x128xf32>
      %18 = arith.addf %15, %17 : vector<8x128xf32>
      %cst_14 = arith.constant 0.000000e+00 : f32
      %19 = vector.broadcast %cst_14 : f32 to vector<8x128xf32>
      %20 = arith.maximumf %18, %19 : vector<8x128xf32>
      %21 = arith.truncf %20 : vector<8x128xf32> to vector<8x128xbf16>
      %c0_15 = arith.constant 0 : index
      %c0_16 = arith.constant 0 : index
      %c0_17 = arith.constant 0 : index
      %22 = vector.load %arg5[%c0_15, %c0_16, %c0_17] : memref<4x128x128xbf16, #tpu.memory_space<vmem>>, vector<1x128x128xbf16>
      %23 = vector.shape_cast %22 : vector<1x128x128xbf16> to vector<128x128xbf16>
      %cst_18 = arith.constant dense<0.000000e+00> : vector<8x128xf32>
      %24 = tpu.matmul %21, %23, %cst_18 {dimension_numbers = #tpu.dot_dimension_numbers<[1], [0], [0], [1], [0, 0, 1, 1], [], []>} : vector<8x128xbf16>, vector<128x128xbf16>, vector<8x128xf32> -> vector<8x128xf32>
      %c0_19 = arith.constant 0 : index
      %c0_20 = arith.constant 0 : index
      %c0_21 = arith.constant 0 : index
      %25 = vector.load %arg6[%c0_19, %c0_20, %c0_21] : memref<4x1x128xf32, #tpu.memory_space<vmem>>, vector<1x1x128xf32>
      %26 = vector.shape_cast %25 : vector<1x1x128xf32> to vector<1x128xf32>
      %27 = vector.broadcast %26 : vector<1x128xf32> to vector<8x128xf32>
      %28 = arith.addf %24, %27 : vector<8x128xf32>
      %cst_22 = arith.constant 0.000000e+00 : f32
      %29 = vector.broadcast %cst_22 : f32 to vector<8x128xf32>
      %30 = arith.maximumf %28, %29 : vector<8x128xf32>
      %31 = arith.truncf %30 : vector<8x128xf32> to vector<8x128xbf16>
      %c0_23 = arith.constant 0 : index
      %c0_24 = arith.constant 0 : index
      %c0_25 = arith.constant 0 : index
      %32 = vector.load %arg7[%c0_23, %c0_24, %c0_25] : memref<4x128x128xbf16, #tpu.memory_space<vmem>>, vector<1x128x128xbf16>
      %33 = vector.shape_cast %32 : vector<1x128x128xbf16> to vector<128x128xbf16>
      %cst_26 = arith.constant dense<0.000000e+00> : vector<8x128xf32>
      %34 = tpu.matmul %31, %33, %cst_26 {dimension_numbers = #tpu.dot_dimension_numbers<[1], [0], [0], [1], [0, 0, 1, 1], [], []>} : vector<8x128xbf16>, vector<128x128xbf16>, vector<8x128xf32> -> vector<8x128xf32>
      %c0_27 = arith.constant 0 : index
      %c0_28 = arith.constant 0 : index
      %c0_29 = arith.constant 0 : index
      %35 = vector.load %arg8[%c0_27, %c0_28, %c0_29] : memref<4x1x128xf32, #tpu.memory_space<vmem>>, vector<1x1x128xf32>
      %36 = vector.shape_cast %35 : vector<1x1x128xf32> to vector<1x128xf32>
      %37 = vector.broadcast %36 : vector<1x128xf32> to vector<8x128xf32>
      %38 = arith.addf %34, %37 : vector<8x128xf32>
      %cst_30 = arith.constant 0.000000e+00 : f32
      %39 = vector.broadcast %cst_30 : f32 to vector<8x128xf32>
      %40 = arith.maximumf %38, %39 : vector<8x128xf32>
      %41 = arith.addf %20, %40 : vector<8x128xf32>
      %42 = arith.truncf %41 : vector<8x128xf32> to vector<8x128xbf16>
      %c1 = arith.constant 1 : index
      %c0_31 = arith.constant 0 : index
      %c0_32 = arith.constant 0 : index
      %43 = vector.load %arg5[%c1, %c0_31, %c0_32] : memref<4x128x128xbf16, #tpu.memory_space<vmem>>, vector<1x128x128xbf16>
      %44 = vector.shape_cast %43 : vector<1x128x128xbf16> to vector<128x128xbf16>
      %cst_33 = arith.constant dense<0.000000e+00> : vector<8x128xf32>
      %45 = tpu.matmul %42, %44, %cst_33 {dimension_numbers = #tpu.dot_dimension_numbers<[1], [0], [0], [1], [0, 0, 1, 1], [], []>} : vector<8x128xbf16>, vector<128x128xbf16>, vector<8x128xf32> -> vector<8x128xf32>
      %c1_34 = arith.constant 1 : index
      %c0_35 = arith.constant 0 : index
      %c0_36 = arith.constant 0 : index
      %46 = vector.load %arg6[%c1_34, %c0_35, %c0_36] : memref<4x1x128xf32, #tpu.memory_space<vmem>>, vector<1x1x128xf32>
      %47 = vector.shape_cast %46 : vector<1x1x128xf32> to vector<1x128xf32>
      %48 = vector.broadcast %47 : vector<1x128xf32> to vector<8x128xf32>
      %49 = arith.addf %45, %48 : vector<8x128xf32>
      %cst_37 = arith.constant 0.000000e+00 : f32
      %50 = vector.broadcast %cst_37 : f32 to vector<8x128xf32>
      %51 = arith.maximumf %49, %50 : vector<8x128xf32>
      %52 = arith.truncf %51 : vector<8x128xf32> to vector<8x128xbf16>
      %c1_38 = arith.constant 1 : index
      %c0_39 = arith.constant 0 : index
      %c0_40 = arith.constant 0 : index
      %53 = vector.load %arg7[%c1_38, %c0_39, %c0_40] : memref<4x128x128xbf16, #tpu.memory_space<vmem>>, vector<1x128x128xbf16>
      %54 = vector.shape_cast %53 : vector<1x128x128xbf16> to vector<128x128xbf16>
      %cst_41 = arith.constant dense<0.000000e+00> : vector<8x128xf32>
      %55 = tpu.matmul %52, %54, %cst_41 {dimension_numbers = #tpu.dot_dimension_numbers<[1], [0], [0], [1], [0, 0, 1, 1], [], []>} : vector<8x128xbf16>, vector<128x128xbf16>, vector<8x128xf32> -> vector<8x128xf32>
      %c1_42 = arith.constant 1 : index
      %c0_43 = arith.constant 0 : index
      %c0_44 = arith.constant 0 : index
      %56 = vector.load %arg8[%c1_42, %c0_43, %c0_44] : memref<4x1x128xf32, #tpu.memory_space<vmem>>, vector<1x1x128xf32>
      %57 = vector.shape_cast %56 : vector<1x1x128xf32> to vector<1x128xf32>
      %58 = vector.broadcast %57 : vector<1x128xf32> to vector<8x128xf32>
      %59 = arith.addf %55, %58 : vector<8x128xf32>
      %cst_45 = arith.constant 0.000000e+00 : f32
      %60 = vector.broadcast %cst_45 : f32 to vector<8x128xf32>
      %61 = arith.maximumf %59, %60 : vector<8x128xf32>
      %62 = arith.addf %41, %61 : vector<8x128xf32>
      %63 = arith.truncf %62 : vector<8x128xf32> to vector<8x128xbf16>
      %c2 = arith.constant 2 : index
      %c0_46 = arith.constant 0 : index
      %c0_47 = arith.constant 0 : index
      %64 = vector.load %arg5[%c2, %c0_46, %c0_47] : memref<4x128x128xbf16, #tpu.memory_space<vmem>>, vector<1x128x128xbf16>
      %65 = vector.shape_cast %64 : vector<1x128x128xbf16> to vector<128x128xbf16>
      %cst_48 = arith.constant dense<0.000000e+00> : vector<8x128xf32>
      %66 = tpu.matmul %63, %65, %cst_48 {dimension_numbers = #tpu.dot_dimension_numbers<[1], [0], [0], [1], [0, 0, 1, 1], [], []>} : vector<8x128xbf16>, vector<128x128xbf16>, vector<8x128xf32> -> vector<8x128xf32>
      %c2_49 = arith.constant 2 : index
      %c0_50 = arith.constant 0 : index
      %c0_51 = arith.constant 0 : index
      %67 = vector.load %arg6[%c2_49, %c0_50, %c0_51] : memref<4x1x128xf32, #tpu.memory_space<vmem>>, vector<1x1x128xf32>
      %68 = vector.shape_cast %67 : vector<1x1x128xf32> to vector<1x128xf32>
      %69 = vector.broadcast %68 : vector<1x128xf32> to vector<8x128xf32>
      %70 = arith.addf %66, %69 : vector<8x128xf32>
      %cst_52 = arith.constant 0.000000e+00 : f32
      %71 = vector.broadcast %cst_52 : f32 to vector<8x128xf32>
      %72 = arith.maximumf %70, %71 : vector<8x128xf32>
      %73 = arith.truncf %72 : vector<8x128xf32> to vector<8x128xbf16>
      %c2_53 = arith.constant 2 : index
      %c0_54 = arith.constant 0 : index
      %c0_55 = arith.constant 0 : index
      %74 = vector.load %arg7[%c2_53, %c0_54, %c0_55] : memref<4x128x128xbf16, #tpu.memory_space<vmem>>, vector<1x128x128xbf16>
      %75 = vector.shape_cast %74 : vector<1x128x128xbf16> to vector<128x128xbf16>
      %cst_56 = arith.constant dense<0.000000e+00> : vector<8x128xf32>
      %76 = tpu.matmul %73, %75, %cst_56 {dimension_numbers = #tpu.dot_dimension_numbers<[1], [0], [0], [1], [0, 0, 1, 1], [], []>} : vector<8x128xbf16>, vector<128x128xbf16>, vector<8x128xf32> -> vector<8x128xf32>
      %c2_57 = arith.constant 2 : index
      %c0_58 = arith.constant 0 : index
      %c0_59 = arith.constant 0 : index
      %77 = vector.load %arg8[%c2_57, %c0_58, %c0_59] : memref<4x1x128xf32, #tpu.memory_space<vmem>>, vector<1x1x128xf32>
      %78 = vector.shape_cast %77 : vector<1x1x128xf32> to vector<1x128xf32>
      %79 = vector.broadcast %78 : vector<1x128xf32> to vector<8x128xf32>
      %80 = arith.addf %76, %79 : vector<8x128xf32>
      %cst_60 = arith.constant 0.000000e+00 : f32
      %81 = vector.broadcast %cst_60 : f32 to vector<8x128xf32>
      %82 = arith.maximumf %80, %81 : vector<8x128xf32>
      %83 = arith.addf %62, %82 : vector<8x128xf32>
      %84 = arith.truncf %83 : vector<8x128xf32> to vector<8x128xbf16>
      %c3 = arith.constant 3 : index
      %c0_61 = arith.constant 0 : index
      %c0_62 = arith.constant 0 : index
      %85 = vector.load %arg5[%c3, %c0_61, %c0_62] : memref<4x128x128xbf16, #tpu.memory_space<vmem>>, vector<1x128x128xbf16>
      %86 = vector.shape_cast %85 : vector<1x128x128xbf16> to vector<128x128xbf16>
      %cst_63 = arith.constant dense<0.000000e+00> : vector<8x128xf32>
      %87 = tpu.matmul %84, %86, %cst_63 {dimension_numbers = #tpu.dot_dimension_numbers<[1], [0], [0], [1], [0, 0, 1, 1], [], []>} : vector<8x128xbf16>, vector<128x128xbf16>, vector<8x128xf32> -> vector<8x128xf32>
      %c3_64 = arith.constant 3 : index
      %c0_65 = arith.constant 0 : index
      %c0_66 = arith.constant 0 : index
      %88 = vector.load %arg6[%c3_64, %c0_65, %c0_66] : memref<4x1x128xf32, #tpu.memory_space<vmem>>, vector<1x1x128xf32>
      %89 = vector.shape_cast %88 : vector<1x1x128xf32> to vector<1x128xf32>
      %90 = vector.broadcast %89 : vector<1x128xf32> to vector<8x128xf32>
      %91 = arith.addf %87, %90 : vector<8x128xf32>
      %cst_67 = arith.constant 0.000000e+00 : f32
      %92 = vector.broadcast %cst_67 : f32 to vector<8x128xf32>
      %93 = arith.maximumf %91, %92 : vector<8x128xf32>
      %94 = arith.truncf %93 : vector<8x128xf32> to vector<8x128xbf16>
      %c3_68 = arith.constant 3 : index
      %c0_69 = arith.constant 0 : index
      %c0_70 = arith.constant 0 : index
      %95 = vector.load %arg7[%c3_68, %c0_69, %c0_70] : memref<4x128x128xbf16, #tpu.memory_space<vmem>>, vector<1x128x128xbf16>
      %96 = vector.shape_cast %95 : vector<1x128x128xbf16> to vector<128x128xbf16>
      %cst_71 = arith.constant dense<0.000000e+00> : vector<8x128xf32>
      %97 = tpu.matmul %94, %96, %cst_71 {dimension_numbers = #tpu.dot_dimension_numbers<[1], [0], [0], [1], [0, 0, 1, 1], [], []>} : vector<8x128xbf16>, vector<128x128xbf16>, vector<8x128xf32> -> vector<8x128xf32>
      %c3_72 = arith.constant 3 : index
      %c0_73 = arith.constant 0 : index
      %c0_74 = arith.constant 0 : index
      %98 = vector.load %arg8[%c3_72, %c0_73, %c0_74] : memref<4x1x128xf32, #tpu.memory_space<vmem>>, vector<1x1x128xf32>
      %99 = vector.shape_cast %98 : vector<1x1x128xf32> to vector<1x128xf32>
      %100 = vector.broadcast %99 : vector<1x128xf32> to vector<8x128xf32>
      %101 = arith.addf %97, %100 : vector<8x128xf32>
      %cst_75 = arith.constant 0.000000e+00 : f32
      %102 = vector.broadcast %cst_75 : f32 to vector<8x128xf32>
      %103 = arith.maximumf %101, %102 : vector<8x128xf32>
      %104 = arith.addf %83, %103 : vector<8x128xf32>
      %105 = arith.truncf %104 : vector<8x128xf32> to vector<8x128xbf16>
      %c0_76 = arith.constant 0 : index
      %c0_77 = arith.constant 0 : index
      %106 = vector.load %arg11[%c0_76, %c0_77] : memref<8x128xbf16, #tpu.memory_space<vmem>>, vector<8x128xbf16>
      tpu.vector_store %arg11[%c0_76, %c0_77], %105 {strides = array<i32>} : memref<8x128xbf16, #tpu.memory_space<vmem>>, vector<8x128xbf16>,
    } else {
    }
    %c0 = arith.constant 0 : index
    %c0_1 = arith.constant 0 : index
    %3 = vector.load %arg11[%c0, %c0_1] : memref<8x128xbf16, #tpu.memory_space<vmem>>, vector<8x128xbf16>
    %c0_2 = arith.constant 0 : index
    %c0_3 = arith.constant 0 : index
    %4 = vector.load %arg9[%c0_2, %c0_3] : memref<128x128xbf16, #tpu.memory_space<vmem>>, vector<128x128xbf16>
    %cst = arith.constant dense<0.000000e+00> : vector<8x128xf32>
    %5 = tpu.matmul %3, %4, %cst {dimension_numbers = #tpu.dot_dimension_numbers<[1], [0], [0], [1], [0, 0, 1, 1], [], []>} : vector<8x128xbf16>, vector<128x128xbf16>, vector<8x128xf32> -> vector<8x128xf32>
    %6 = arith.negf %5 : vector<8x128xf32>
    %7 = math.exp %6 : vector<8x128xf32>
    %cst_4 = arith.constant 1.000000e+00 : f32
    %8 = vector.broadcast %cst_4 : f32 to vector<8x128xf32>
    %9 = arith.addf %8, %7 : vector<8x128xf32>
    %10 = arith.divf %8, %9 : vector<8x128xf32>
    %11 = arith.truncf %10 : vector<8x128xf32> to vector<8x128xbf16>
    %c0_5 = arith.constant 0 : index
    %c0_6 = arith.constant 0 : index
    %12 = vector.load %arg10[%c0_5, %c0_6] : memref<8x128xbf16, #tpu.memory_space<vmem>>, vector<8x128xbf16>
    tpu.vector_store %arg10[%c0_5, %c0_6], %11 {strides = array<i32>} : memref<8x128xbf16, #tpu.memory_space<vmem>>, vector<8x128xbf16>,
    return
  }
  func.func @transform_0(%arg0: i32, %arg1: i32) -> (i32, i32) {
    %c0_i32 = arith.constant 0 : i32
    %c0_i32_0 = arith.constant 0 : i32
    return %arg0, %c0_i32 : i32, i32
  }
  func.func @transform_1(%arg0: i32, %arg1: i32) -> (i32, i32) {
    %c0_i32 = arith.constant 0 : i32
    %c0_i32_0 = arith.constant 0 : i32
    %c0_i32_1 = arith.constant 0 : i32
    return %c0_i32, %c0_i32_0 : i32, i32
  }
  func.func @transform_2(%arg0: i32, %arg1: i32) -> (i32, i32) {
    %c0_i32 = arith.constant 0 : i32
    %c0_i32_0 = arith.constant 0 : i32
    %c0_i32_1 = arith.constant 0 : i32
    return %c0_i32, %c0_i32_0 : i32, i32
  }
  func.func @transform_3(%arg0: i32, %arg1: i32) -> (i32, i32, i32) {
    %c0_i32 = arith.constant 0 : i32
    %c0_i32_0 = arith.constant 0 : i32
    %c0_i32_1 = arith.constant 0 : i32
    %c0_i32_2 = arith.constant 0 : i32
    return %c0_i32, %c0_i32_0, %c0_i32_1 : i32, i32, i32
  }
  func.func @transform_4(%arg0: i32, %arg1: i32) -> (i32, i32, i32) {
    %c0_i32 = arith.constant 0 : i32
    %c0_i32_0 = arith.constant 0 : i32
    %c0_i32_1 = arith.constant 0 : i32
    %c0_i32_2 = arith.constant 0 : i32
    return %c0_i32, %c0_i32_0, %c0_i32_1 : i32, i32, i32
  }
  func.func @transform_5(%arg0: i32, %arg1: i32) -> (i32, i32, i32) {
    %c0_i32 = arith.constant 0 : i32
    %c0_i32_0 = arith.constant 0 : i32
    %c0_i32_1 = arith.constant 0 : i32
    %c0_i32_2 = arith.constant 0 : i32
    return %c0_i32, %c0_i32_0, %c0_i32_1 : i32, i32, i32
  }
  func.func @transform_6(%arg0: i32, %arg1: i32) -> (i32, i32, i32) {
    %c0_i32 = arith.constant 0 : i32
    %c0_i32_0 = arith.constant 0 : i32
    %c0_i32_1 = arith.constant 0 : i32
    %c0_i32_2 = arith.constant 0 : i32
    return %c0_i32, %c0_i32_0, %c0_i32_1 : i32, i32, i32
  }
  func.func @transform_7(%arg0: i32, %arg1: i32) -> (i32, i32) {
    %c0_i32 = arith.constant 0 : i32
    %c0_i32_0 = arith.constant 0 : i32
    return %c0_i32, %arg1 : i32, i32
  }
  func.func @transform_8(%arg0: i32, %arg1: i32) -> (i32, i32) {
    %c0_i32 = arith.constant 0 : i32
    return %arg0, %arg1 : i32, i32
  }
}

</mosaic_0001>

<llo_original>
// kernel: residual_fcnet_forward.1
$region0: #{residual_fcnet_forward.1}
  #allocation0 [shape = 'u32[]', space=smem, size = 0x4, offset = 0x4, fixed_abs, tag = 'smem constant byte address 0x4 - core index']
  #allocation1 [shape = 'u32[144,128]{1,0:T(1,128)}', space=vmem, size = 0x12000, scoped, tag = 'internal scratch']
  #allocation2 [shape = 'bf16[8,128]{1,0:T(8,128)(2,1)}', space=vmem, size = 0x800, scoped, tag = 'scratch operand']
  %s0 = inlined_call_operand.vmem [shape: bf16[8,8], index: 0, kind: input, shape index: {}]
  %s1 = inlined_call_operand.vmem [shape: bf16[8,128], index: 1, kind: input, shape index: {}]
  %s2 = inlined_call_operand.vmem [shape: f32[1,128], index: 2, kind: input, shape index: {}]
  %s3 = inlined_call_operand.hbm [shape: bf16[4,128,128], index: 3, kind: input, shape index: {}]
  %s4 = inlined_call_operand.vmem [shape: f32[4,1,128], index: 4, kind: input, shape index: {}]
  %s5 = inlined_call_operand.hbm [shape: bf16[4,128,128], index: 5, kind: input, shape index: {}]
  %s6 = inlined_call_operand.vmem [shape: f32[4,1,128], index: 6, kind: input, shape index: {}]
  %s7 = inlined_call_operand.hbm [shape: bf16[128,128], index: 7, kind: input, shape index: {}]
  %s8 = inlined_call_operand.hbm [shape: bf16[8,128], index: 8, kind: output, shape index: {}]
  %s9 = sld [smem:[#allocation0]]
  $region58: #{residual_fcnet_forward.1} parent=0
    _
  %s11 = ssub.s32 1, %s9
  %s12 = scalar_select 0, %s11, %s9
  $region1: #{residual_fcnet_forward.1} parent=0
    #allocation3 [shape = 'u8[131072]{0}', space=vmem, size = 0x20000, scoped, tag = 'input window, operand 3, single buffered']
    #allocation4 [shape = 's32[1]{0}', space=sflag, size = 0x4, scoped, tag = 'scoped memory for residual_fcnet_forward.1']
    #allocation5 [shape = 's32[1]{0}', space=sflag, size = 0x4, scoped, tag = 'scoped memory for residual_fcnet_forward.1']
    #allocation6 [shape = 'u8[131072]{0}', space=vmem, size = 0x20000, scoped, tag = 'input window, operand 5, single buffered']
    #allocation7 [shape = 's32[1]{0}', space=sflag, size = 0x4, scoped, tag = 'scoped memory for residual_fcnet_forward.1']
    #allocation8 [shape = 'u8[32768]{0}', space=vmem, size = 0x8000, scoped, tag = 'input window, operand 7, single buffered']
    #allocation9 [shape = 'u8[2048]{0}', space=vmem, size = 0x800, scoped, tag = 'output window, operand 0, single buffered']
    %13 = vsyncpa [#allocation4], 0
    %14 = vsyncpa [#allocation7], 0
    %15 = vsyncpa [#allocation5], 0
    // Predicated region
    $region2: #{residual_fcnet_forward.1} parent=1 // pred_check
      _
    $region3: #{residual_fcnet_forward.1} parent=1 // pred_check_branch
      %17 = sbr.rel (0) target = $region5
    $region4: #{residual_fcnet_forward.1} parent=1 // pred_region
      _
    $region5: #{residual_fcnet_forward.1} parent=1 // pred_fallthru
      _
    // Predicated region
    $region6: #{residual_fcnet_forward.1} parent=1 // pred_check
      _
    $region7: #{residual_fcnet_forward.1} parent=1 // pred_check_branch
      %19 = sbr.rel (0) target = $region9
    $region8: #{residual_fcnet_forward.1} parent=1 // pred_region
      _
    $region9: #{residual_fcnet_forward.1} parent=1 // pred_fallthru
      _
    // Predicated region
    $region10: #{residual_fcnet_forward.1} parent=1 // pred_check
      _
    $region11: #{residual_fcnet_forward.1} parent=1 // pred_check_branch
      %21 = sbr.rel (0) target = $region13
    $region12: #{residual_fcnet_forward.1} parent=1 // pred_region
      _
    $region13: #{residual_fcnet_forward.1} parent=1 // pred_fallthru
      _
    // Predicated region
    $region14: #{residual_fcnet_forward.1} parent=1 // pred_check
      _
    $region15: #{residual_fcnet_forward.1} parent=1 // pred_check_branch
      %23 = sbr.rel (0) target = $region17
    $region16: #{residual_fcnet_forward.1} parent=1 // pred_region
      %s25 = ssub.s32 4096, 4096
      %26 = vsyncadd [#allocation4], %s25
      %s27 = sshll.u32 [#allocation3], 4
      %s28 = int_to_ptr.vmem [resolvable:$true] %s27
      %33 = dma.hbm_to_vmem [thread:$0]  %s3, 4096, %s28, [#allocation4], 64, 64, 4
    $region17: #{residual_fcnet_forward.1} parent=1 // pred_fallthru
      _
    // Predicated region
    $region18: #{residual_fcnet_forward.1} parent=1 // pred_check
      _
    $region19: #{residual_fcnet_forward.1} parent=1 // pred_check_branch
      %35 = sbr.rel (0) target = $region21
    $region20: #{residual_fcnet_forward.1} parent=1 // pred_region
      _
    $region21: #{residual_fcnet_forward.1} parent=1 // pred_fallthru
      _
    // Predicated region
    $region22: #{residual_fcnet_forward.1} parent=1 // pred_check
      _
    $region23: #{residual_fcnet_forward.1} parent=1 // pred_check_branch
      %37 = sbr.rel (0) target = $region25
    $region24: #{residual_fcnet_forward.1} parent=1 // pred_region
      %s39 = ssub.s32 4096, 4096
      %40 = vsyncadd [#allocation7], %s39
      %s41 = sshll.u32 [#allocation6], 4
      %s42 = int_to_ptr.vmem [resolvable:$true] %s41
      %47 = dma.hbm_to_vmem [thread:$0]  %s5, 4096, %s42, [#allocation7], 64, 64, 4
    $region25: #{residual_fcnet_forward.1} parent=1 // pred_fallthru
      _
    // Predicated region
    $region26: #{residual_fcnet_forward.1} parent=1 // pred_check
      _
    $region27: #{residual_fcnet_forward.1} parent=1 // pred_check_branch
      %49 = sbr.rel (0) target = $region29
    $region28: #{residual_fcnet_forward.1} parent=1 // pred_region
      _
    $region29: #{residual_fcnet_forward.1} parent=1 // pred_fallthru
      _
    // Predicated region
    $region30: #{residual_fcnet_forward.1} parent=1 // pred_check
      _
    $region31: #{residual_fcnet_forward.1} parent=1 // pred_check_branch
      %51 = sbr.rel (0) target = $region33
    $region32: #{residual_fcnet_forward.1} parent=1 // pred_region
      %s53 = ssub.s32 1024, 1024
      %54 = vsyncadd [#allocation7], %s53
      %s55 = sshll.u32 [#allocation8], 4
      %s56 = int_to_ptr.vmem [resolvable:$true] %s55
      %61 = dma.hbm_to_vmem [thread:$0]  %s7, 1024, %s56, [#allocation7], 64, 64, 4
    $region33: #{residual_fcnet_forward.1} parent=1 // pred_fallthru
      _
    // Predicated region
    $region34: #{residual_fcnet_forward.1} parent=1 // pred_check
      _
    $region35: #{residual_fcnet_forward.1} parent=1 // pred_check_branch
      %63 = sbr.rel (0) target = $region37
    $region36: #{residual_fcnet_forward.1} parent=1 // pred_region
      %64 = dma.done [#allocation4], 4096
    $region37: #{residual_fcnet_forward.1} parent=1 // pred_fallthru
      _
    // Predicated region
    $region38: #{residual_fcnet_forward.1} parent=1 // pred_check
      _
    $region39: #{residual_fcnet_forward.1} parent=1 // pred_check_branch
      %66 = sbr.rel (0) target = $region41
    $region40: #{residual_fcnet_forward.1} parent=1 // pred_region
      %67 = dma.done [#allocation7], 4096
    $region41: #{residual_fcnet_forward.1} parent=1 // pred_fallthru
      _
    // Predicated region
    $region42: #{residual_fcnet_forward.1} parent=1 // pred_check
      _
    $region43: #{residual_fcnet_forward.1} parent=1 // pred_check_branch
      %69 = sbr.rel (0) target = $region45
    $region44: #{residual_fcnet_forward.1} parent=1 // pred_region
      %70 = dma.done [#allocation7], 1024
    $region45: #{residual_fcnet_forward.1} parent=1 // pred_fallthru
      _
    %p72 = scmp.eq.s32.totalorder 0, 0
    // Predicated region
    $region46: #{residual_fcnet_forward.1} parent=1 // pred_check
      %p73 = pneg %p72
    $region47: #{residual_fcnet_forward.1} parent=1 // pred_check_branch
      %75 = sbr.rel (%p73) target = $region49
    $region48: #{residual_fcnet_forward.1} parent=1 // pred_region
      %v76 = vld [vmem:[%s0] sm:$0xf]
      %v77 = vld [vmem:[%s1] sm:$0xf]
      %v78 = vld [vmem:[%s2] sm:$0x1]
      %v80 = vlaneseq
      %v81 = vshrl.u32 %v80, 7
      %v82 = vsub.s32 0, %v81
      %v83 = vrot.slane %v78, %v82
      %vm85 = vcmask 64512
      %v87 = vsel %vm85, %v76, 0
      %vm89 = vcmask 1043456
      %v91 = vsel %vm89, %v77, 0
      %93 = vmatprep.subr.bf16.mxu0 0
      %94 = vmatpush1.bf16.msra.mxu0 %v91
      %95 = vmatprep.subr.bf16.mxu0 0
      %96 = vmatpush1.bf16.msra.mxu0 0
      %97 = vmatprep.subr.bf16.mxu0 0
      %98 = vmatpush1.bf16.msra.mxu0 0
      %99 = vmatprep.subr.bf16.mxu0 0
      %100 = vmatpush1.bf16.msra.mxu0 0
      %101 = vmatprep.subr.bf16.mxu0 0
      %102 = vmatpush1.bf16.msra.mxu0 0
      %103 = vmatprep.subr.bf16.mxu0 0
      %104 = vmatpush1.bf16.msra.mxu0 0
      %105 = vmatprep.subr.bf16.mxu0 0
      %106 = vmatpush1.bf16.msra.mxu0 0
      %107 = vmatprep.subr.bf16.mxu0 0
      %108 = vmatpush1.bf16.msra.mxu0 0
      %109 = vmatprep.subr.bf16.mxu0 0
      %110 = vmatpush1.bf16.msra.mxu0 0
      %111 = vmatprep.subr.bf16.mxu0 0
      %112 = vmatpush1.bf16.msra.mxu0 0
      %113 = vmatprep.subr.bf16.mxu0 0
      %114 = vmatpush1.bf16.msra.mxu0 0
      %115 = vmatprep.subr.bf16.mxu0 0
      %116 = vmatpush1.bf16.msra.mxu0 0
      %117 = vmatprep.subr.bf16.mxu0 0
      %118 = vmatpush1.bf16.msra.mxu0 0
      %119 = vmatprep.subr.bf16.mxu0 0
      %120 = vmatpush1.bf16.msra.mxu0 0
      %121 = vmatprep.subr.bf16.mxu0 0
      %122 = vmatpush1.bf16.msra.mxu0 0
      %123 = vmatprep.subr.bf16.mxu0 0
      %124 = vmatpush1.bf16.msra.mxu0 0
      %125 = vmatprep.mubr.bf16.mxu0 0
      %126 = vmatmul.mubr.bf16.gmra.mrb[0].mxu0 %v87
      %v127 = vpop.f32.mrb[0].mxu0
      %v128 = vadd.f32 %v83, %v127
      %v129 = vpop.f32.mrb[0].mxu0
      %v130 = vpop.f32.mrb[0].mxu0
      %v131 = vpop.f32.mrb[0].mxu0
      %132 = vdwg.mxu0
      %v133 = vmax.f32 %v128, 0.0
      %v134 = vpack.c.bf16 %v133, %v133
      %v135 = vld [vmem:[#allocation3] sm:$0xf]
      %v136 = vld [vmem:[#allocation3 + $0x4] sm:$0xf]
      %v137 = vld [vmem:[#allocation3 + $0x8] sm:$0xf]
      %v138 = vld [vmem:[#allocation3 + $0xc] sm:$0xf]
      %v139 = vld [vmem:[#allocation3 + $0x10] sm:$0xf]
      %v140 = vld [vmem:[#allocation3 + $0x14] sm:$0xf]
      %v141 = vld [vmem:[#allocation3 + $0x18] sm:$0xf]
      %v142 = vld [vmem:[#allocation3 + $0x1c] sm:$0xf]
      %v143 = vld [vmem:[#allocation3 + $0x20] sm:$0xf]
      %v144 = vld [vmem:[#allocation3 + $0x24] sm:$0xf]
      %v145 = vld [vmem:[#allocation3 + $0x28] sm:$0xf]
      %v146 = vld [vmem:[#allocation3 + $0x2c] sm:$0xf]
      %v147 = vld [vmem:[#allocation3 + $0x30] sm:$0xf]
      %v148 = vld [vmem:[#allocation3 + $0x34] sm:$0xf]
      %v149 = vld [vmem:[#allocation3 + $0x38] sm:$0xf]
      %v150 = vld [vmem:[#allocation3 + $0x3c] sm:$0xf]
      %v151 = vld [vmem:[%s4] sm:$0x1]
      %v153 = vlaneseq
      %v154 = vshrl.u32 %v153, 7
      %v155 = vsub.s32 0, %v154
      %v156 = vrot.slane %v151, %v155
      %v174 = vunpack.c.l.b16 %v135
      %v175 = vunpack.c.l.b16 %v136
      %v176 = vunpack.c.l.b16 %v137
      %v177 = vunpack.c.l.b16 %v138
      %v178 = vunpack.c.l.b16 %v139
      %v179 = vunpack.c.l.b16 %v140
      %v180 = vunpack.c.l.b16 %v141
      %v181 = vunpack.c.l.b16 %v142
      %v182 = vunpack.c.l.b16 %v143
      %v183 = vunpack.c.l.b16 %v144
      %v184 = vunpack.c.l.b16 %v145
      %v185 = vunpack.c.l.b16 %v146
      %v186 = vunpack.c.l.b16 %v147
      %v187 = vunpack.c.l.b16 %v148
      %v188 = vunpack.c.l.b16 %v149
      %v189 = vunpack.c.l.b16 %v150
      %v190 = vpack.c.b16 %v175, %v174
      %v191 = vpack.c.b16 %v177, %v176
      %v192 = vpack.c.b16 %v179, %v178
      %v193 = vpack.c.b16 %v181, %v180
      %v194 = vpack.c.b16 %v183, %v182
      %v195 = vpack.c.b16 %v185, %v184
      %v196 = vpack.c.b16 %v187, %v186
      %v197 = vpack.c.b16 %v189, %v188
      %206 = vmatprep.subr.bf16.mxu0 0
      %207 = vmatpush1.bf16.msra.mxu0 %v190
      %208 = vmatprep.subr.bf16.mxu0 0
      %209 = vmatpush1.bf16.msra.mxu0 %v191
      %210 = vmatprep.subr.bf16.mxu0 0
      %211 = vmatpush1.bf16.msra.mxu0 %v192
      %212 = vmatprep.subr.bf16.mxu0 0
      %213 = vmatpush1.bf16.msra.mxu0 %v193
      %214 = vmatprep.subr.bf16.mxu0 0
      %215 = vmatpush1.bf16.msra.mxu0 %v194
      %216 = vmatprep.subr.bf16.mxu0 0
      %217 = vmatpush1.bf16.msra.mxu0 %v195
      %218 = vmatprep.subr.bf16.mxu0 0
      %219 = vmatpush1.bf16.msra.mxu0 %v196
      %220 = vmatprep.subr.bf16.mxu0 0
      %221 = vmatpush1.bf16.msra.mxu0 %v197
      %222 = vmatprep.subr.bf16.mxu0 0
      %223 = vmatpush1.bf16.msra.mxu0 0
      %224 = vmatprep.subr.bf16.mxu0 0
      %225 = vmatpush1.bf16.msra.mxu0 0
      %226 = vmatprep.subr.bf16.mxu0 0
      %227 = vmatpush1.bf16.msra.mxu0 0
      %228 = vmatprep.subr.bf16.mxu0 0
      %229 = vmatpush1.bf16.msra.mxu0 0
      %230 = vmatprep.subr.bf16.mxu0 0
      %231 = vmatpush1.bf16.msra.mxu0 0
      %232 = vmatprep.subr.bf16.mxu0 0
      %233 = vmatpush1.bf16.msra.mxu0 0
      %234 = vmatprep.subr.bf16.mxu0 0
      %235 = vmatpush1.bf16.msra.mxu0 0
      %236 = vmatprep.subr.bf16.mxu0 0
      %237 = vmatpush1.bf16.msra.mxu0 0
      %238 = vmatprep.mubr.bf16.mxu0 0
      %239 = vmatmul.mubr.bf16.gmra.mrb[0].mxu0 %v134
      %v240 = vpop.f32.mrb[0].mxu0
      %v241 = vadd.f32 %v156, %v240
      %v242 = vpop.f32.mrb[0].mxu0
      %v243 = vpop.f32.mrb[0].mxu0
      %v244 = vpop.f32.mrb[0].mxu0
      %245 = vdwg.mxu0
      %v246 = vmax.f32 %v241, 0.0
      %v247 = vpack.c.bf16 %v246, %v246
      %v248 = vld [vmem:[#allocation6] sm:$0xf]
      %v249 = vld [vmem:[#allocation6 + $0x4] sm:$0xf]
      %v250 = vld [vmem:[#allocation6 + $0x8] sm:$0xf]
      %v251 = vld [vmem:[#allocation6 + $0xc] sm:$0xf]
      %v252 = vld [vmem:[#allocation6 + $0x10] sm:$0xf]
      %v253 = vld [vmem:[#allocation6 + $0x14] sm:$0xf]
      %v254 = vld [vmem:[#allocation6 + $0x18] sm:$0xf]
      %v255 = vld [vmem:[#allocation6 + $0x1c] sm:$0xf]
      %v256 = vld [vmem:[#allocation6 + $0x20] sm:$0xf]
      %v257 = vld [vmem:[#allocation6 + $0x24] sm:$0xf]
      %v258 = vld [vmem:[#allocation6 + $0x28] sm:$0xf]
      %v259 = vld [vmem:[#allocation6 + $0x2c] sm:$0xf]
      %v260 = vld [vmem:[#allocation6 + $0x30] sm:$0xf]
      %v261 = vld [vmem:[#allocation6 + $0x34] sm:$0xf]
      %v262 = vld [vmem:[#allocation6 + $0x38] sm:$0xf]
      %v263 = vld [vmem:[#allocation6 + $0x3c] sm:$0xf]
      %v264 = vld [vmem:[%s6] sm:$0x1]
      %v266 = vlaneseq
      %v267 = vshrl.u32 %v266, 7
      %v268 = vsub.s32 0, %v267
      %v269 = vrot.slane %v264, %v268
      %v287 = vunpack.c.l.b16 %v248
      %v288 = vunpack.c.l.b16 %v249
      %v289 = vunpack.c.l.b16 %v250
      %v290 = vunpack.c.l.b16 %v251
      %v291 = vunpack.c.l.b16 %v252
      %v292 = vunpack.c.l.b16 %v253
      %v293 = vunpack.c.l.b16 %v254
      %v294 = vunpack.c.l.b16 %v255
      %v295 = vunpack.c.l.b16 %v256
      %v296 = vunpack.c.l.b16 %v257
      %v297 = vunpack.c.l.b16 %v258
      %v298 = vunpack.c.l.b16 %v259
      %v299 = vunpack.c.l.b16 %v260
      %v300 = vunpack.c.l.b16 %v261
      %v301 = vunpack.c.l.b16 %v262
      %v302 = vunpack.c.l.b16 %v263
      %v303 = vpack.c.b16 %v288, %v287
      %v304 = vpack.c.b16 %v290, %v289
      %v305 = vpack.c.b16 %v292, %v291
      %v306 = vpack.c.b16 %v294, %v293
      %v307 = vpack.c.b16 %v296, %v295
      %v308 = vpack.c.b16 %v298, %v297
      %v309 = vpack.c.b16 %v300, %v299
      %v310 = vpack.c.b16 %v302, %v301
      %319 = vmatprep.subr.bf16.mxu0 0
      %320 = vmatpush1.bf16.msra.mxu0 %v303
      %321 = vmatprep.subr.bf16.mxu0 0
      %322 = vmatpush1.bf16.msra.mxu0 %v304
      %323 = vmatprep.subr.bf16.mxu0 0
      %324 = vmatpush1.bf16.msra.mxu0 %v305
      %325 = vmatprep.subr.bf16.mxu0 0
      %326 = vmatpush1.bf16.msra.mxu0 %v306
      %327 = vmatprep.subr.bf16.mxu0 0
      %328 = vmatpush1.bf16.msra.mxu0 %v307
      %329 = vmatprep.subr.bf16.mxu0 0
      %330 = vmatpush1.bf16.msra.mxu0 %v308
      %331 = vmatprep.subr.bf16.mxu0 0
      %332 = vmatpush1.bf16.msra.mxu0 %v309
      %333 = vmatprep.subr.bf16.mxu0 0
      %334 = vmatpush1.bf16.msra.mxu0 %v310
      %335 = vmatprep.subr.bf16.mxu0 0
      %336 = vmatpush1.bf16.msra.mxu0 0
      %337 = vmatprep.subr.bf16.mxu0 0
      %338 = vmatpush1.bf16.msra.mxu0 0
      %339 = vmatprep.subr.bf16.mxu0 0
      %340 = vmatpush1.bf16.msra.mxu0 0
      %341 = vmatprep.subr.bf16.mxu0 0
      %342 = vmatpush1.bf16.msra.mxu0 0
      %343 = vmatprep.subr.bf16.mxu0 0
      %344 = vmatpush1.bf16.msra.mxu0 0
      %345 = vmatprep.subr.bf16.mxu0 0
      %346 = vmatpush1.bf16.msra.mxu0 0
      %347 = vmatprep.subr.bf16.mxu0 0
      %348 = vmatpush1.bf16.msra.mxu0 0
      %349 = vmatprep.subr.bf16.mxu0 0
      %350 = vmatpush1.bf16.msra.mxu0 0
      %351 = vmatprep.mubr.bf16.mxu0 0
      %352 = vmatmul.mubr.bf16.gmra.mrb[0].mxu0 %v247
      %v353 = vpop.f32.mrb[0].mxu0
      %v354 = vadd.f32 %v269, %v353
      %v355 = vpop.f32.mrb[0].mxu0
      %v356 = vpop.f32.mrb[0].mxu0
      %v357 = vpop.f32.mrb[0].mxu0
      %358 = vdwg.mxu0
      %v359 = vmax.f32 %v354, 0.0
      %v360 = vadd.f32 %v133, %v359
      %v361 = vpack.c.bf16 %v360, %v360
      %s362 = scalar_lea.vmem [#allocation3], 64
      %v363 = vld [vmem:[%s362] sm:$0xf]
      %v364 = vld [vmem:[%s362 + $0x4] sm:$0xf]
      %v365 = vld [vmem:[%s362 + $0x8] sm:$0xf]
      %v366 = vld [vmem:[%s362 + $0xc] sm:$0xf]
      %v367 = vld [vmem:[%s362 + $0x10] sm:$0xf]
      %v368 = vld [vmem:[%s362 + $0x14] sm:$0xf]
      %v369 = vld [vmem:[%s362 + $0x18] sm:$0xf]
      %v370 = vld [vmem:[%s362 + $0x1c] sm:$0xf]
      %v371 = vld [vmem:[%s362 + $0x20] sm:$0xf]
      %v372 = vld [vmem:[%s362 + $0x24] sm:$0xf]
      %v373 = vld [vmem:[%s362 + $0x28] sm:$0xf]
      %v374 = vld [vmem:[%s362 + $0x2c] sm:$0xf]
      %v375 = vld [vmem:[%s362 + $0x30] sm:$0xf]
      %v376 = vld [vmem:[%s362 + $0x34] sm:$0xf]
      %v377 = vld [vmem:[%s362 + $0x38] sm:$0xf]
      %v378 = vld [vmem:[%s362 + $0x3c] sm:$0xf]
      %s379 = scalar_lea.vmem %s4, 1
      %v380 = vld [vmem:[%s379] sm:$0x1]
      %v382 = vlaneseq
      %v383 = vshrl.u32 %v382, 7
      %v384 = vsub.s32 0, %v383
      %v385 = vrot.slane %v380, %v384
      %v403 = vunpack.c.l.b16 %v363
      %v404 = vunpack.c.l.b16 %v364
      %v405 = vunpack.c.l.b16 %v365
      %v406 = vunpack.c.l.b16 %v366
      %v407 = vunpack.c.l.b16 %v367
      %v408 = vunpack.c.l.b16 %v368
      %v409 = vunpack.c.l.b16 %v369
      %v410 = vunpack.c.l.b16 %v370
      %v411 = vunpack.c.l.b16 %v371
      %v412 = vunpack.c.l.b16 %v372
      %v413 = vunpack.c.l.b16 %v373
      %v414 = vunpack.c.l.b16 %v374
      %v415 = vunpack.c.l.b16 %v375
      %v416 = vunpack.c.l.b16 %v376
      %v417 = vunpack.c.l.b16 %v377
      %v418 = vunpack.c.l.b16 %v378
      %v419 = vpack.c.b16 %v404, %v403
      %v420 = vpack.c.b16 %v406, %v405
      %v421 = vpack.c.b16 %v408, %v407
      %v422 = vpack.c.b16 %v410, %v409
      %v423 = vpack.c.b16 %v412, %v411
      %v424 = vpack.c.b16 %v414, %v413
      %v425 = vpack.c.b16 %v416, %v415
      %v426 = vpack.c.b16 %v418, %v417
      %435 = vmatprep.subr.bf16.mxu0 0
      %436 = vmatpush1.bf16.msra.mxu0 %v419
      %437 = vmatprep.subr.bf16.mxu0 0
      %438 = vmatpush1.bf16.msra.mxu0 %v420
      %439 = vmatprep.subr.bf16.mxu0 0
      %440 = vmatpush1.bf16.msra.mxu0 %v421
      %441 = vmatprep.subr.bf16.mxu0 0
      %442 = vmatpush1.bf16.msra.mxu0 %v422
      %443 = vmatprep.subr.bf16.mxu0 0
      %444 = vmatpush1.bf16.msra.mxu0 %v423
      %445 = vmatprep.subr.bf16.mxu0 0
      %446 = vmatpush1.bf16.msra.mxu0 %v424
      %447 = vmatprep.subr.bf16.mxu0 0
      %448 = vmatpush1.bf16.msra.mxu0 %v425
      %449 = vmatprep.subr.bf16.mxu0 0
      %450 = vmatpush1.bf16.msra.mxu0 %v426
      %451 = vmatprep.subr.bf16.mxu0 0
      %452 = vmatpush1.bf16.msra.mxu0 0
      %453 = vmatprep.subr.bf16.mxu0 0
      %454 = vmatpush1.bf16.msra.mxu0 0
      %455 = vmatprep.subr.bf16.mxu0 0
      %456 = vmatpush1.bf16.msra.mxu0 0
      %457 = vmatprep.subr.bf16.mxu0 0
      %458 = vmatpush1.bf16.msra.mxu0 0
      %459 = vmatprep.subr.bf16.mxu0 0
      %460 = vmatpush1.bf16.msra.mxu0 0
      %461 = vmatprep.subr.bf16.mxu0 0
      %462 = vmatpush1.bf16.msra.mxu0 0
      %463 = vmatprep.subr.bf16.mxu0 0
      %464 = vmatpush1.bf16.msra.mxu0 0
      %465 = vmatprep.subr.bf16.mxu0 0
      %466 = vmatpush1.bf16.msra.mxu0 0
      %467 = vmatprep.mubr.bf16.mxu0 0
      %468 = vmatmul.mubr.bf16.gmra.mrb[0].mxu0 %v361
      %v469 = vpop.f32.mrb[0].mxu0
      %v470 = vadd.f32 %v385, %v469
      %v471 = vpop.f32.mrb[0].mxu0
      %v472 = vpop.f32.mrb[0].mxu0
      %v473 = vpop.f32.mrb[0].mxu0
      %474 = vdwg.mxu0
      %v475 = vmax.f32 %v470, 0.0
      %v476 = vpack.c.bf16 %v475, %v475
      %s477 = scalar_lea.vmem [#allocation6], 64
      %v478 = vld [vmem:[%s477] sm:$0xf]
      %v479 = vld [vmem:[%s477 + $0x4] sm:$0xf]
      %v480 = vld [vmem:[%s477 + $0x8] sm:$0xf]
      %v481 = vld [vmem:[%s477 + $0xc] sm:$0xf]
      %v482 = vld [vmem:[%s477 + $0x10] sm:$0xf]
      %v483 = vld [vmem:[%s477 + $0x14] sm:$0xf]
      %v484 = vld [vmem:[%s477 + $0x18] sm:$0xf]
      %v485 = vld [vmem:[%s477 + $0x1c] sm:$0xf]
      %v486 = vld [vmem:[%s477 + $0x20] sm:$0xf]
      %v487 = vld [vmem:[%s477 + $0x24] sm:$0xf]
      %v488 = vld [vmem:[%s477 + $0x28] sm:$0xf]
      %v489 = vld [vmem:[%s477 + $0x2c] sm:$0xf]
      %v490 = vld [vmem:[%s477 + $0x30] sm:$0xf]
      %v491 = vld [vmem:[%s477 + $0x34] sm:$0xf]
      %v492 = vld [vmem:[%s477 + $0x38] sm:$0xf]
      %v493 = vld [vmem:[%s477 + $0x3c] sm:$0xf]
      %s494 = scalar_lea.vmem %s6, 1
      %v495 = vld [vmem:[%s494] sm:$0x1]
      %v497 = vlaneseq
      %v498 = vshrl.u32 %v497, 7
      %v499 = vsub.s32 0, %v498
      %v500 = vrot.slane %v495, %v499
      %v518 = vunpack.c.l.b16 %v478
      %v519 = vunpack.c.l.b16 %v479
      %v520 = vunpack.c.l.b16 %v480
      %v521 = vunpack.c.l.b16 %v481
      %v522 = vunpack.c.l.b16 %v482
      %v523 = vunpack.c.l.b16 %v483
      %v524 = vunpack.c.l.b16 %v484
      %v525 = vunpack.c.l.b16 %v485
      %v526 = vunpack.c.l.b16 %v486
      %v527 = vunpack.c.l.b16 %v487
      %v528 = vunpack.c.l.b16 %v488
      %v529 = vunpack.c.l.b16 %v489
      %v530 = vunpack.c.l.b16 %v490
      %v531 = vunpack.c.l.b16 %v491
      %v532 = vunpack.c.l.b16 %v492
      %v533 = vunpack.c.l.b16 %v493
      %v534 = vpack.c.b16 %v519, %v518
      %v535 = vpack.c.b16 %v521, %v520
      %v536 = vpack.c.b16 %v523, %v522
      %v537 = vpack.c.b16 %v525, %v524
      %v538 = vpack.c.b16 %v527, %v526
      %v539 = vpack.c.b16 %v529, %v528
      %v540 = vpack.c.b16 %v531, %v530
      %v541 = vpack.c.b16 %v533, %v532
      %550 = vmatprep.subr.bf16.mxu0 0
      %551 = vmatpush1.bf16.msra.mxu0 %v534
      %552 = vmatprep.subr.bf16.mxu0 0
      %553 = vmatpush1.bf16.msra.mxu0 %v535
      %554 = vmatprep.subr.bf16.mxu0 0
      %555 = vmatpush1.bf16.msra.mxu0 %v536
      %556 = vmatprep.subr.bf16.mxu0 0
      %557 = vmatpush1.bf16.msra.mxu0 %v537
      %558 = vmatprep.subr.bf16.mxu0 0
      %559 = vmatpush1.bf16.msra.mxu0 %v538
      %560 = vmatprep.subr.bf16.mxu0 0
      %561 = vmatpush1.bf16.msra.mxu0 %v539
      %562 = vmatprep.subr.bf16.mxu0 0
      %563 = vmatpush1.bf16.msra.mxu0 %v540
      %564 = vmatprep.subr.bf16.mxu0 0
      %565 = vmatpush1.bf16.msra.mxu0 %v541
      %566 = vmatprep.subr.bf16.mxu0 0
      %567 = vmatpush1.bf16.msra.mxu0 0
      %568 = vmatprep.subr.bf16.mxu0 0
      %569 = vmatpush1.bf16.msra.mxu0 0
      %570 = vmatprep.subr.bf16.mxu0 0
      %571 = vmatpush1.bf16.msra.mxu0 0
      %572 = vmatprep.subr.bf16.mxu0 0
      %573 = vmatpush1.bf16.msra.mxu0 0
      %574 = vmatprep.subr.bf16.mxu0 0
      %575 = vmatpush1.bf16.msra.mxu0 0
      %576 = vmatprep.subr.bf16.mxu0 0
      %577 = vmatpush1.bf16.msra.mxu0 0
      %578 = vmatprep.subr.bf16.mxu0 0
      %579 = vmatpush1.bf16.msra.mxu0 0
      %580 = vmatprep.subr.bf16.mxu0 0
      %581 = vmatpush1.bf16.msra.mxu0 0
      %582 = vmatprep.mubr.bf16.mxu0 0
      %583 = vmatmul.mubr.bf16.gmra.mrb[0].mxu0 %v476
      %v584 = vpop.f32.mrb[0].mxu0
      %v585 = vadd.f32 %v500, %v584
      %v586 = vpop.f32.mrb[0].mxu0
      %v587 = vpop.f32.mrb[0].mxu0
      %v588 = vpop.f32.mrb[0].mxu0
      %589 = vdwg.mxu0
      %v590 = vmax.f32 %v585, 0.0
      %v591 = vadd.f32 %v360, %v590
      %v592 = vpack.c.bf16 %v591, %v591
      %s593 = scalar_lea.vmem [#allocation3], 128
      %v594 = vld [vmem:[%s593] sm:$0xf]
      %v595 = vld [vmem:[%s593 + $0x4] sm:$0xf]
      %v596 = vld [vmem:[%s593 + $0x8] sm:$0xf]
      %v597 = vld [vmem:[%s593 + $0xc] sm:$0xf]
      %v598 = vld [vmem:[%s593 + $0x10] sm:$0xf]
      %v599 = vld [vmem:[%s593 + $0x14] sm:$0xf]
      %v600 = vld [vmem:[%s593 + $0x18] sm:$0xf]
      %v601 = vld [vmem:[%s593 + $0x1c] sm:$0xf]
      %v602 = vld [vmem:[%s593 + $0x20] sm:$0xf]
      %v603 = vld [vmem:[%s593 + $0x24] sm:$0xf]
      %v604 = vld [vmem:[%s593 + $0x28] sm:$0xf]
      %v605 = vld [vmem:[%s593 + $0x2c] sm:$0xf]
      %v606 = vld [vmem:[%s593 + $0x30] sm:$0xf]
      %v607 = vld [vmem:[%s593 + $0x34] sm:$0xf]
      %v608 = vld [vmem:[%s593 + $0x38] sm:$0xf]
      %v609 = vld [vmem:[%s593 + $0x3c] sm:$0xf]
      %s610 = scalar_lea.vmem %s4, 2
      %v611 = vld [vmem:[%s610] sm:$0x1]
      %v613 = vlaneseq
      %v614 = vshrl.u32 %v613, 7
      %v615 = vsub.s32 0, %v614
      %v616 = vrot.slane %v611, %v615
      %v634 = vunpack.c.l.b16 %v594
      %v635 = vunpack.c.l.b16 %v595
      %v636 = vunpack.c.l.b16 %v596
      %v637 = vunpack.c.l.b16 %v597
      %v638 = vunpack.c.l.b16 %v598
      %v639 = vunpack.c.l.b16 %v599
      %v640 = vunpack.c.l.b16 %v600
      %v641 = vunpack.c.l.b16 %v601
      %v642 = vunpack.c.l.b16 %v602
      %v643 = vunpack.c.l.b16 %v603
      %v644 = vunpack.c.l.b16 %v604
      %v645 = vunpack.c.l.b16 %v605
      %v646 = vunpack.c.l.b16 %v606
      %v647 = vunpack.c.l.b16 %v607
      %v648 = vunpack.c.l.b16 %v608
      %v649 = vunpack.c.l.b16 %v609
      %v650 = vpack.c.b16 %v635, %v634
      %v651 = vpack.c.b16 %v637, %v636
      %v652 = vpack.c.b16 %v639, %v638
      %v653 = vpack.c.b16 %v641, %v640
      %v654 = vpack.c.b16 %v643, %v642
      %v655 = vpack.c.b16 %v645, %v644
      %v656 = vpack.c.b16 %v647, %v646
      %v657 = vpack.c.b16 %v649, %v648
      %666 = vmatprep.subr.bf16.mxu0 0
      %667 = vmatpush1.bf16.msra.mxu0 %v650
      %668 = vmatprep.subr.bf16.mxu0 0
      %669 = vmatpush1.bf16.msra.mxu0 %v651
      %670 = vmatprep.subr.bf16.mxu0 0
      %671 = vmatpush1.bf16.msra.mxu0 %v652
      %672 = vmatprep.subr.bf16.mxu0 0
      %673 = vmatpush1.bf16.msra.mxu0 %v653
      %674 = vmatprep.subr.bf16.mxu0 0
      %675 = vmatpush1.bf16.msra.mxu0 %v654
      %676 = vmatprep.subr.bf16.mxu0 0
      %677 = vmatpush1.bf16.msra.mxu0 %v655
      %678 = vmatprep.subr.bf16.mxu0 0
      %679 = vmatpush1.bf16.msra.mxu0 %v656
      %680 = vmatprep.subr.bf16.mxu0 0
      %681 = vmatpush1.bf16.msra.mxu0 %v657
      %682 = vmatprep.subr.bf16.mxu0 0
      %683 = vmatpush1.bf16.msra.mxu0 0
      %684 = vmatprep.subr.bf16.mxu0 0
      %685 = vmatpush1.bf16.msra.mxu0 0
      %686 = vmatprep.subr.bf16.mxu0 0
      %687 = vmatpush1.bf16.msra.mxu0 0
      %688 = vmatprep.subr.bf16.mxu0 0
      %689 = vmatpush1.bf16.msra.mxu0 0
      %690 = vmatprep.subr.bf16.mxu0 0
      %691 = vmatpush1.bf16.msra.mxu0 0
      %692 = vmatprep.subr.bf16.mxu0 0
      %693 = vmatpush1.bf16.msra.mxu0 0
      %694 = vmatprep.subr.bf16.mxu0 0
      %695 = vmatpush1.bf16.msra.mxu0 0
      %696 = vmatprep.subr.bf16.mxu0 0
      %697 = vmatpush1.bf16.msra.mxu0 0
      %698 = vmatprep.mubr.bf16.mxu0 0
      %699 = vmatmul.mubr.bf16.gmra.mrb[0].mxu0 %v592
      %v700 = vpop.f32.mrb[0].mxu0
      %v701 = vadd.f32 %v616, %v700
      %v702 = vpop.f32.mrb[0].mxu0
      %v703 = vpop.f32.mrb[0].mxu0
      %v704 = vpop.f32.mrb[0].mxu0
      %705 = vdwg.mxu0
      %v706 = vmax.f32 %v701, 0.0
      %v707 = vpack.c.bf16 %v706, %v706
      %s708 = scalar_lea.vmem [#allocation6], 128
      %v709 = vld [vmem:[%s708] sm:$0xf]
      %v710 = vld [vmem:[%s708 + $0x4] sm:$0xf]
      %v711 = vld [vmem:[%s708 + $0x8] sm:$0xf]
      %v712 = vld [vmem:[%s708 + $0xc] sm:$0xf]
      %v713 = vld [vmem:[%s708 + $0x10] sm:$0xf]
      %v714 = vld [vmem:[%s708 + $0x14] sm:$0xf]
      %v715 = vld [vmem:[%s708 + $0x18] sm:$0xf]
      %v716 = vld [vmem:[%s708 + $0x1c] sm:$0xf]
      %v717 = vld [vmem:[%s708 + $0x20] sm:$0xf]
      %v718 = vld [vmem:[%s708 + $0x24] sm:$0xf]
      %v719 = vld [vmem:[%s708 + $0x28] sm:$0xf]
      %v720 = vld [vmem:[%s708 + $0x2c] sm:$0xf]
      %v721 = vld [vmem:[%s708 + $0x30] sm:$0xf]
      %v722 = vld [vmem:[%s708 + $0x34] sm:$0xf]
      %v723 = vld [vmem:[%s708 + $0x38] sm:$0xf]
      %v724 = vld [vmem:[%s708 + $0x3c] sm:$0xf]
      %s725 = scalar_lea.vmem %s6, 2
      %v726 = vld [vmem:[%s725] sm:$0x1]
      %v728 = vlaneseq
      %v729 = vshrl.u32 %v728, 7
      %v730 = vsub.s32 0, %v729
      %v731 = vrot.slane %v726, %v730
      %v749 = vunpack.c.l.b16 %v709
      %v750 = vunpack.c.l.b16 %v710
      %v751 = vunpack.c.l.b16 %v711
      %v752 = vunpack.c.l.b16 %v712
      %v753 = vunpack.c.l.b16 %v713
      %v754 = vunpack.c.l.b16 %v714
      %v755 = vunpack.c.l.b16 %v715
      %v756 = vunpack.c.l.b16 %v716
      %v757 = vunpack.c.l.b16 %v717
      %v758 = vunpack.c.l.b16 %v718
      %v759 = vunpack.c.l.b16 %v719
      %v760 = vunpack.c.l.b16 %v720
      %v761 = vunpack.c.l.b16 %v721
      %v762 = vunpack.c.l.b16 %v722
      %v763 = vunpack.c.l.b16 %v723
      %v764 = vunpack.c.l.b16 %v724
      %v765 = vpack.c.b16 %v750, %v749
      %v766 = vpack.c.b16 %v752, %v751
      %v767 = vpack.c.b16 %v754, %v753
      %v768 = vpack.c.b16 %v756, %v755
      %v769 = vpack.c.b16 %v758, %v757
      %v770 = vpack.c.b16 %v760, %v759
      %v771 = vpack.c.b16 %v762, %v761
      %v772 = vpack.c.b16 %v764, %v763
      %781 = vmatprep.subr.bf16.mxu0 0
      %782 = vmatpush1.bf16.msra.mxu0 %v765
      %783 = vmatprep.subr.bf16.mxu0 0
      %784 = vmatpush1.bf16.msra.mxu0 %v766
      %785 = vmatprep.subr.bf16.mxu0 0
      %786 = vmatpush1.bf16.msra.mxu0 %v767
      %787 = vmatprep.subr.bf16.mxu0 0
      %788 = vmatpush1.bf16.msra.mxu0 %v768
      %789 = vmatprep.subr.bf16.mxu0 0
      %790 = vmatpush1.bf16.msra.mxu0 %v769
      %791 = vmatprep.subr.bf16.mxu0 0
      %792 = vmatpush1.bf16.msra.mxu0 %v770
      %793 = vmatprep.subr.bf16.mxu0 0
      %794 = vmatpush1.bf16.msra.mxu0 %v771
      %795 = vmatprep.subr.bf16.mxu0 0
      %796 = vmatpush1.bf16.msra.mxu0 %v772
      %797 = vmatprep.subr.bf16.mxu0 0
      %798 = vmatpush1.bf16.msra.mxu0 0
      %799 = vmatprep.subr.bf16.mxu0 0
      %800 = vmatpush1.bf16.msra.mxu0 0
      %801 = vmatprep.subr.bf16.mxu0 0
      %802 = vmatpush1.bf16.msra.mxu0 0
      %803 = vmatprep.subr.bf16.mxu0 0
      %804 = vmatpush1.bf16.msra.mxu0 0
      %805 = vmatprep.subr.bf16.mxu0 0
      %806 = vmatpush1.bf16.msra.mxu0 0
      %807 = vmatprep.subr.bf16.mxu0 0
      %808 = vmatpush1.bf16.msra.mxu0 0
      %809 = vmatprep.subr.bf16.mxu0 0
      %810 = vmatpush1.bf16.msra.mxu0 0
      %811 = vmatprep.subr.bf16.mxu0 0
      %812 = vmatpush1.bf16.msra.mxu0 0
      %813 = vmatprep.mubr.bf16.mxu0 0
      %814 = vmatmul.mubr.bf16.gmra.mrb[0].mxu0 %v707
      %v815 = vpop.f32.mrb[0].mxu0
      %v816 = vadd.f32 %v731, %v815
      %v817 = vpop.f32.mrb[0].mxu0
      %v818 = vpop.f32.mrb[0].mxu0
      %v819 = vpop.f32.mrb[0].mxu0
      %820 = vdwg.mxu0
      %v821 = vmax.f32 %v816, 0.0
      %v822 = vadd.f32 %v591, %v821
      %v823 = vpack.c.bf16 %v822, %v822
      %s824 = scalar_lea.vmem [#allocation3], 192
      %v825 = vld [vmem:[%s824] sm:$0xf]
      %v826 = vld [vmem:[%s824 + $0x4] sm:$0xf]
      %v827 = vld [vmem:[%s824 + $0x8] sm:$0xf]
      %v828 = vld [vmem:[%s824 + $0xc] sm:$0xf]
      %v829 = vld [vmem:[%s824 + $0x10] sm:$0xf]
      %v830 = vld [vmem:[%s824 + $0x14] sm:$0xf]
      %v831 = vld [vmem:[%s824 + $0x18] sm:$0xf]
      %v832 = vld [vmem:[%s824 + $0x1c] sm:$0xf]
      %v833 = vld [vmem:[%s824 + $0x20] sm:$0xf]
      %v834 = vld [vmem:[%s824 + $0x24] sm:$0xf]
      %v835 = vld [vmem:[%s824 + $0x28] sm:$0xf]
      %v836 = vld [vmem:[%s824 + $0x2c] sm:$0xf]
      %v837 = vld [vmem:[%s824 + $0x30] sm:$0xf]
      %v838 = vld [vmem:[%s824 + $0x34] sm:$0xf]
      %v839 = vld [vmem:[%s824 + $0x38] sm:$0xf]
      %v840 = vld [vmem:[%s824 + $0x3c] sm:$0xf]
      %s841 = scalar_lea.vmem %s4, 3
      %v842 = vld [vmem:[%s841] sm:$0x1]
      %v844 = vlaneseq
      %v845 = vshrl.u32 %v844, 7
      %v846 = vsub.s32 0, %v845
      %v847 = vrot.slane %v842, %v846
      %v865 = vunpack.c.l.b16 %v825
      %v866 = vunpack.c.l.b16 %v826
      %v867 = vunpack.c.l.b16 %v827
      %v868 = vunpack.c.l.b16 %v828
      %v869 = vunpack.c.l.b16 %v829
      %v870 = vunpack.c.l.b16 %v830
      %v871 = vunpack.c.l.b16 %v831
      %v872 = vunpack.c.l.b16 %v832
      %v873 = vunpack.c.l.b16 %v833
      %v874 = vunpack.c.l.b16 %v834
      %v875 = vunpack.c.l.b16 %v835
      %v876 = vunpack.c.l.b16 %v836
      %v877 = vunpack.c.l.b16 %v837
      %v878 = vunpack.c.l.b16 %v838
      %v879 = vunpack.c.l.b16 %v839
      %v880 = vunpack.c.l.b16 %v840
      %v881 = vpack.c.b16 %v866, %v865
      %v882 = vpack.c.b16 %v868, %v867
      %v883 = vpack.c.b16 %v870, %v869
      %v884 = vpack.c.b16 %v872, %v871
      %v885 = vpack.c.b16 %v874, %v873
      %v886 = vpack.c.b16 %v876, %v875
      %v887 = vpack.c.b16 %v878, %v877
      %v888 = vpack.c.b16 %v880, %v879
      %897 = vmatprep.subr.bf16.mxu0 0
      %898 = vmatpush1.bf16.msra.mxu0 %v881
      %899 = vmatprep.subr.bf16.mxu0 0
      %900 = vmatpush1.bf16.msra.mxu0 %v882
      %901 = vmatprep.subr.bf16.mxu0 0
      %902 = vmatpush1.bf16.msra.mxu0 %v883
      %903 = vmatprep.subr.bf16.mxu0 0
      %904 = vmatpush1.bf16.msra.mxu0 %v884
      %905 = vmatprep.subr.bf16.mxu0 0
      %906 = vmatpush1.bf16.msra.mxu0 %v885
      %907 = vmatprep.subr.bf16.mxu0 0
      %908 = vmatpush1.bf16.msra.mxu0 %v886
      %909 = vmatprep.subr.bf16.mxu0 0
      %910 = vmatpush1.bf16.msra.mxu0 %v887
      %911 = vmatprep.subr.bf16.mxu0 0
      %912 = vmatpush1.bf16.msra.mxu0 %v888
      %913 = vmatprep.subr.bf16.mxu0 0
      %914 = vmatpush1.bf16.msra.mxu0 0
      %915 = vmatprep.subr.bf16.mxu0 0
      %916 = vmatpush1.bf16.msra.mxu0 0
      %917 = vmatprep.subr.bf16.mxu0 0
      %918 = vmatpush1.bf16.msra.mxu0 0
      %919 = vmatprep.subr.bf16.mxu0 0
      %920 = vmatpush1.bf16.msra.mxu0 0
      %921 = vmatprep.subr.bf16.mxu0 0
      %922 = vmatpush1.bf16.msra.mxu0 0
      %923 = vmatprep.subr.bf16.mxu0 0
      %924 = vmatpush1.bf16.msra.mxu0 0
      %925 = vmatprep.subr.bf16.mxu0 0
      %926 = vmatpush1.bf16.msra.mxu0 0
      %927 = vmatprep.subr.bf16.mxu0 0
      %928 = vmatpush1.bf16.msra.mxu0 0
      %929 = vmatprep.mubr.bf16.mxu0 0
      %930 = vmatmul.mubr.bf16.gmra.mrb[0].mxu0 %v823
      %v931 = vpop.f32.mrb[0].mxu0
      %v932 = vadd.f32 %v847, %v931
      %v933 = vpop.f32.mrb[0].mxu0
      %v934 = vpop.f32.mrb[0].mxu0
      %v935 = vpop.f32.mrb[0].mxu0
      %936 = vdwg.mxu0
      %v937 = vmax.f32 %v932, 0.0
      %v938 = vpack.c.bf16 %v937, %v937
      %s939 = scalar_lea.vmem [#allocation6], 192
      %v940 = vld [vmem:[%s939] sm:$0xf]
      %v941 = vld [vmem:[%s939 + $0x4] sm:$0xf]
      %v942 = vld [vmem:[%s939 + $0x8] sm:$0xf]
      %v943 = vld [vmem:[%s939 + $0xc] sm:$0xf]
      %v944 = vld [vmem:[%s939 + $0x10] sm:$0xf]
      %v945 = vld [vmem:[%s939 + $0x14] sm:$0xf]
      %v946 = vld [vmem:[%s939 + $0x18] sm:$0xf]
      %v947 = vld [vmem:[%s939 + $0x1c] sm:$0xf]
      %v948 = vld [vmem:[%s939 + $0x20] sm:$0xf]
      %v949 = vld [vmem:[%s939 + $0x24] sm:$0xf]
      %v950 = vld [vmem:[%s939 + $0x28] sm:$0xf]
      %v951 = vld [vmem:[%s939 + $0x2c] sm:$0xf]
      %v952 = vld [vmem:[%s939 + $0x30] sm:$0xf]
      %v953 = vld [vmem:[%s939 + $0x34] sm:$0xf]
      %v954 = vld [vmem:[%s939 + $0x38] sm:$0xf]
      %v955 = vld [vmem:[%s939 + $0x3c] sm:$0xf]
      %s956 = scalar_lea.vmem %s6, 3
      %v957 = vld [vmem:[%s956] sm:$0x1]
      %v959 = vlaneseq
      %v960 = vshrl.u32 %v959, 7
      %v961 = vsub.s32 0, %v960
      %v962 = vrot.slane %v957, %v961
      %v980 = vunpack.c.l.b16 %v940
      %v981 = vunpack.c.l.b16 %v941
      %v982 = vunpack.c.l.b16 %v942
      %v983 = vunpack.c.l.b16 %v943
      %v984 = vunpack.c.l.b16 %v944
      %v985 = vunpack.c.l.b16 %v945
      %v986 = vunpack.c.l.b16 %v946
      %v987 = vunpack.c.l.b16 %v947
      %v988 = vunpack.c.l.b16 %v948
      %v989 = vunpack.c.l.b16 %v949
      %v990 = vunpack.c.l.b16 %v950
      %v991 = vunpack.c.l.b16 %v951
      %v992 = vunpack.c.l.b16 %v952
      %v993 = vunpack.c.l.b16 %v953
      %v994 = vunpack.c.l.b16 %v954
      %v995 = vunpack.c.l.b16 %v955
      %v996 = vpack.c.b16 %v981, %v980
      %v997 = vpack.c.b16 %v983, %v982
      %v998 = vpack.c.b16 %v985, %v984
      %v999 = vpack.c.b16 %v987, %v986
      %v1000 = vpack.c.b16 %v989, %v988
      %v1001 = vpack.c.b16 %v991, %v990
      %v1002 = vpack.c.b16 %v993, %v992
      %v1003 = vpack.c.b16 %v995, %v994
      %1012 = vmatprep.subr.bf16.mxu0 0
      %1013 = vmatpush1.bf16.msra.mxu0 %v996
      %1014 = vmatprep.subr.bf16.mxu0 0
      %1015 = vmatpush1.bf16.msra.mxu0 %v997
      %1016 = vmatprep.subr.bf16.mxu0 0
      %1017 = vmatpush1.bf16.msra.mxu0 %v998
      %1018 = vmatprep.subr.bf16.mxu0 0
      %1019 = vmatpush1.bf16.msra.mxu0 %v999
      %1020 = vmatprep.subr.bf16.mxu0 0
      %1021 = vmatpush1.bf16.msra.mxu0 %v1000
      %1022 = vmatprep.subr.bf16.mxu0 0
      %1023 = vmatpush1.bf16.msra.mxu0 %v1001
      %1024 = vmatprep.subr.bf16.mxu0 0
      %1025 = vmatpush1.bf16.msra.mxu0 %v1002
      %1026 = vmatprep.subr.bf16.mxu0 0
      %1027 = vmatpush1.bf16.msra.mxu0 %v1003
      %1028 = vmatprep.subr.bf16.mxu0 0
      %1029 = vmatpush1.bf16.msra.mxu0 0
      %1030 = vmatprep.subr.bf16.mxu0 0
      %1031 = vmatpush1.bf16.msra.mxu0 0
      %1032 = vmatprep.subr.bf16.mxu0 0
      %1033 = vmatpush1.bf16.msra.mxu0 0
      %1034 = vmatprep.subr.bf16.mxu0 0
      %1035 = vmatpush1.bf16.msra.mxu0 0
      %1036 = vmatprep.subr.bf16.mxu0 0
      %1037 = vmatpush1.bf16.msra.mxu0 0
      %1038 = vmatprep.subr.bf16.mxu0 0
      %1039 = vmatpush1.bf16.msra.mxu0 0
      %1040 = vmatprep.subr.bf16.mxu0 0
      %1041 = vmatpush1.bf16.msra.mxu0 0
      %1042 = vmatprep.subr.bf16.mxu0 0
      %1043 = vmatpush1.bf16.msra.mxu0 0
      %1044 = vmatprep.mubr.bf16.mxu0 0
      %1045 = vmatmul.mubr.bf16.gmra.mrb[0].mxu0 %v938
      %v1046 = vpop.f32.mrb[0].mxu0
      %v1047 = vadd.f32 %v962, %v1046
      %v1048 = vpop.f32.mrb[0].mxu0
      %v1049 = vpop.f32.mrb[0].mxu0
      %v1050 = vpop.f32.mrb[0].mxu0
      %1051 = vdwg.mxu0
      %v1052 = vmax.f32 %v1047, 0.0
      %v1053 = vadd.f32 %v822, %v1052
      %v1054 = vpack.c.bf16 %v1053, %v1053
      %1055 = vst [vmem:[#allocation2] sm:$0xf] %v1054
    $region49: #{residual_fcnet_forward.1} parent=1 // pred_fallthru
      _
    %v1056 = vld [vmem:[#allocation2] sm:$0xf]
    %v1057 = vld [vmem:[#allocation8] sm:$0xf]
    %v1058 = vld [vmem:[#allocation8 + $0x4] sm:$0xf]
    %v1059 = vld [vmem:[#allocation8 + $0x8] sm:$0xf]
    %v1060 = vld [vmem:[#allocation8 + $0xc] sm:$0xf]
    %v1061 = vld [vmem:[#allocation8 + $0x10] sm:$0xf]
    %v1062 = vld [vmem:[#allocation8 + $0x14] sm:$0xf]
    %v1063 = vld [vmem:[#allocation8 + $0x18] sm:$0xf]
    %v1064 = vld [vmem:[#allocation8 + $0x1c] sm:$0xf]
    %v1065 = vld [vmem:[#allocation8 + $0x20] sm:$0xf]
    %v1066 = vld [vmem:[#allocation8 + $0x24] sm:$0xf]
    %v1067 = vld [vmem:[#allocation8 + $0x28] sm:$0xf]
    %v1068 = vld [vmem:[#allocation8 + $0x2c] sm:$0xf]
    %v1069 = vld [vmem:[#allocation8 + $0x30] sm:$0xf]
    %v1070 = vld [vmem:[#allocation8 + $0x34] sm:$0xf]
    %v1071 = vld [vmem:[#allocation8 + $0x38] sm:$0xf]
    %v1072 = vld [vmem:[#allocation8 + $0x3c] sm:$0xf]
    %v1089 = vunpack.c.l.b16 %v1057
    %v1090 = vunpack.c.l.b16 %v1058
    %v1091 = vunpack.c.l.b16 %v1059
    %v1092 = vunpack.c.l.b16 %v1060
    %v1093 = vunpack.c.l.b16 %v1061
    %v1094 = vunpack.c.l.b16 %v1062
    %v1095 = vunpack.c.l.b16 %v1063
    %v1096 = vunpack.c.l.b16 %v1064
    %v1097 = vunpack.c.l.b16 %v1065
    %v1098 = vunpack.c.l.b16 %v1066
    %v1099 = vunpack.c.l.b16 %v1067
    %v1100 = vunpack.c.l.b16 %v1068
    %v1101 = vunpack.c.l.b16 %v1069
    %v1102 = vunpack.c.l.b16 %v1070
    %v1103 = vunpack.c.l.b16 %v1071
    %v1104 = vunpack.c.l.b16 %v1072
    %v1105 = vpack.c.b16 %v1090, %v1089
    %v1106 = vpack.c.b16 %v1092, %v1091
    %v1107 = vpack.c.b16 %v1094, %v1093
    %v1108 = vpack.c.b16 %v1096, %v1095
    %v1109 = vpack.c.b16 %v1098, %v1097
    %v1110 = vpack.c.b16 %v1100, %v1099
    %v1111 = vpack.c.b16 %v1102, %v1101
    %v1112 = vpack.c.b16 %v1104, %v1103
    %1121 = vmatprep.subr.bf16.mxu0 0
    %1122 = vmatpush1.bf16.msra.mxu0 %v1105
    %1123 = vmatprep.subr.bf16.mxu0 0
    %1124 = vmatpush1.bf16.msra.mxu0 %v1106
    %1125 = vmatprep.subr.bf16.mxu0 0
    %1126 = vmatpush1.bf16.msra.mxu0 %v1107
    %1127 = vmatprep.subr.bf16.mxu0 0
    %1128 = vmatpush1.bf16.msra.mxu0 %v1108
    %1129 = vmatprep.subr.bf16.mxu0 0
    %1130 = vmatpush1.bf16.msra.mxu0 %v1109
    %1131 = vmatprep.subr.bf16.mxu0 0
    %1132 = vmatpush1.bf16.msra.mxu0 %v1110
    %1133 = vmatprep.subr.bf16.mxu0 0
    %1134 = vmatpush1.bf16.msra.mxu0 %v1111
    %1135 = vmatprep.subr.bf16.mxu0 0
    %1136 = vmatpush1.bf16.msra.mxu0 %v1112
    %1137 = vmatprep.subr.bf16.mxu0 0
    %1138 = vmatpush1.bf16.msra.mxu0 0
    %1139 = vmatprep.subr.bf16.mxu0 0
    %1140 = vmatpush1.bf16.msra.mxu0 0
    %1141 = vmatprep.subr.bf16.mxu0 0
    %1142 = vmatpush1.bf16.msra.mxu0 0
    %1143 = vmatprep.subr.bf16.mxu0 0
    %1144 = vmatpush1.bf16.msra.mxu0 0
    %1145 = vmatprep.subr.bf16.mxu0 0
    %1146 = vmatpush1.bf16.msra.mxu0 0
    %1147 = vmatprep.subr.bf16.mxu0 0
    %1148 = vmatpush1.bf16.msra.mxu0 0
    %1149 = vmatprep.subr.bf16.mxu0 0
    %1150 = vmatpush1.bf16.msra.mxu0 0
    %1151 = vmatprep.subr.bf16.mxu0 0
    %1152 = vmatpush1.bf16.msra.mxu0 0
    %1153 = vmatprep.mubr.bf16.mxu0 0
    %1154 = vmatmul.mubr.bf16.gmra.mrb[0].mxu0 %v1056
    %v1155 = vpop.f32.mrb[0].mxu0
    %v1156 = vadd.f32 0.0, %v1155
    %v1157 = vpop.f32.mrb[0].mxu0
    %v1158 = vpop.f32.mrb[0].mxu0
    %v1159 = vpop.f32.mrb[0].mxu0
    %1160 = vdwg.mxu0
    %v1161 = vxor.u32 %v1156, 2147483648
    %v1162 = vmul.f32 %v1161, 1.442695
    %v1163 = vpow.pop %v1162
    %v1164 = vadd.f32 %v1163, 1.0
    %v1165 = vrcp.pop %v1164
    %v1166 = vmul.f32 1.0, %v1165
    %v1167 = vpack.c.bf16 %v1166, %v1166
    %1168 = vst [vmem:[#allocation9] sm:$0xf] %v1167
    // Predicated region
    $region50: #{residual_fcnet_forward.1} parent=1 // pred_check
      _
    $region51: #{residual_fcnet_forward.1} parent=1 // pred_check_branch
      %1170 = sbr.rel (0) target = $region53
    $region52: #{residual_fcnet_forward.1} parent=1 // pred_region
      %s1172 = ssub.s32 64, 64
      %1173 = vsyncadd [#allocation5], %s1172
      %s1175 = sshll.u32 [#allocation9], 4
      %s1176 = int_to_ptr.vmem [resolvable:$true] %s1175
      %1178 = dma.vmem_to_hbm [thread:$0]  %s1176, 64, %s8, [#allocation5]
    $region53: #{residual_fcnet_forward.1} parent=1 // pred_fallthru
      _
    // Predicated region
    $region54: #{residual_fcnet_forward.1} parent=1 // pred_check
      _
    $region55: #{residual_fcnet_forward.1} parent=1 // pred_check_branch
      %1180 = sbr.rel (0) target = $region57
    $region56: #{residual_fcnet_forward.1} parent=1 // pred_region
      %1181 = dma.done [#allocation5], 64
    $region57: #{residual_fcnet_forward.1} parent=1 // pred_fallthru
      _
    %1182 = vsyncpa [#allocation4], 1
    %1183 = vsyncpa [#allocation7], 1
    %1184 = vsyncpa [#allocation5], 1

</llo_original>
